<compile_context>
chip_gen: v6e
topology: v6e:2x2x1
jax: 0.10.0
libtpu: 0.0.40
codegen_flags: <defaults>
</compile_context>

<pallas_src>
import math

import jax
import jax.numpy as jnp
from jax.experimental import pallas as pl
from jax.experimental.pallas import tpu as pltpu

_HALF_LOG_2PI = 0.5 * math.log(2.0 * math.pi)


def _gmm_loss_kernel(len_ref, x_ref, mu_ref, std_ref, pi_ref, out_ref, acc_ref):
    b = pl.program_id(0)
    t = pl.program_id(1)
    n_t = pl.num_programs(1)

    # reset the per-batch lane-wide accumulator at the start of each row's t-loop
    @pl.when(t == 0)
    def _():
        acc_ref[...] = jnp.zeros_like(acc_ref)

    # math in f32 regardless of wire dtype (mandatory on v5e, better everywhere)
    x = x_ref[...].astype(jnp.float32)           # (1, 1, Tt)
    mu = mu_ref[...].astype(jnp.float32)         # (1, K, Tt)
    log_scale = std_ref[...].astype(jnp.float32)  # (1, K, Tt)  (PyTorch: scale = std.exp())
    pi = pi_ref[...].astype(jnp.float32)         # (1, K, Tt)

    # Normal(loc=mu, scale=exp(log_scale)).log_prob(x)
    z = (x - mu) * jnp.exp(-log_scale)
    log_prob = -0.5 * z * z - log_scale - _HALF_LOG_2PI

    # fused log_softmax + logsumexp over the mixture (sublane) axis:
    #   logsumexp_k(log_prob + log_softmax_k(pi))
    # = logsumexp_k(log_prob + pi) - logsumexp_k(pi)
    s = log_prob + pi
    m_s = jnp.max(s, axis=1, keepdims=True)
    lse_s = m_s + jnp.log(jnp.sum(jnp.exp(s - m_s), axis=1, keepdims=True))
    m_p = jnp.max(pi, axis=1, keepdims=True)
    lse_p = m_p + jnp.log(jnp.sum(jnp.exp(pi - m_p), axis=1, keepdims=True))
    lse = lse_s - lse_p                          # (1, 1, Tt)

    # mask padded frames (t >= audio_length[b])
    t_tile = x.shape[-1]
    t_idx = t * t_tile + jax.lax.broadcasted_iota(jnp.int32, lse.shape, 2)
    lse = jnp.where(t_idx < len_ref[b], lse, 0.0)

    # lane-wide accumulate: no cross-lane reduce, no output RMW in the hot loop
    acc_ref[...] += lse

    # single cross-lane reduction + scalar store per batch row
    @pl.when(t == n_t - 1)
    def _():
        out_ref[...] = jnp.sum(acc_ref[...], axis=2, keepdims=True)


def _pick_t_tile(T, t_max=2048):
    if T <= t_max:
        return T
    for cand in range(t_max, 0, -128):
        if T % cand == 0:
            return cand
    return T  # fallback: single full-length tile


def gmm_loss(x, mu, std, pi, audio_lengths, *, t_tile=None):
    B, K, T = mu.shape
    assert x.shape == (B, T)
    assert std.shape == (B, K, T) and pi.shape == (B, K, T)
    if t_tile is None:
        t_tile = _pick_t_tile(T)
    else:
        t_tile = min(t_tile, T)
        assert T % t_tile == 0, "T must be a multiple of the time tile"

    # keep inputs in their wire dtype (bf16 stays bf16 on the HBM wire);
    # the kernel upcasts to f32 after the load.
    x3 = x.reshape(B, 1, T)
    lengths = audio_lengths.astype(jnp.int32)

    grid = (B, T // t_tile)
    per_b = pl.pallas_call(
        _gmm_loss_kernel,
        out_shape=jax.ShapeDtypeStruct((B, 1, 1), jnp.float32),
        grid_spec=pltpu.PrefetchScalarGridSpec(
            num_scalar_prefetch=1,                 # audio_lengths -> SMEM
            grid=grid,
            in_specs=[
                pl.BlockSpec((1, 1, t_tile), lambda b, t, lens: (b, 0, t)),
                pl.BlockSpec((1, K, t_tile), lambda b, t, lens: (b, 0, t)),
                pl.BlockSpec((1, K, t_tile), lambda b, t, lens: (b, 0, t)),
                pl.BlockSpec((1, K, t_tile), lambda b, t, lens: (b, 0, t)),
            ],
            out_specs=pl.BlockSpec((1, 1, 1), lambda b, t, lens: (b, 0, 0)),
            scratch_shapes=[pltpu.VMEM((1, 1, t_tile), jnp.float32)],
        ),
        compiler_params=pltpu.CompilerParams(
            # b is race-free parallel (per-b output blocks) -> megacore on v7x;
            # t is the reduction axis, kept "arbitrary".
            dimension_semantics=("parallel", "arbitrary")),
    )(lengths, x3, mu, std, pi)

    n_valid = jnp.sum(lengths).astype(jnp.float32)
    return -jnp.sum(per_b) / n_valid


if __name__ == "__main__":
    key = jax.random.PRNGKey(0)
    B, K, T = 2, 4, 1024
    kx, km, ks, kp = jax.random.split(key, 4)
    x = jax.random.normal(kx, (B, T), jnp.float32)
    mu = jax.random.normal(km, (B, K, T), jnp.float32)
    std = 0.1 * jax.random.normal(ks, (B, K, T), jnp.float32)   # log-scale
    pi = jax.random.normal(kp, (B, K, T), jnp.float32)
    audio_lengths = jnp.array([1024, 700], dtype=jnp.int32)

    # pure-JAX reference (same masked per-frame GMM NLL)
    log_w = jax.nn.log_softmax(pi, axis=1)
    logp = (-0.5 * ((x[:, None, :] - mu) * jnp.exp(-std)) ** 2
            - std - 0.5 * jnp.log(2.0 * jnp.pi))
    lse_ref = jax.scipy.special.logsumexp(logp + log_w, axis=1)           # (B, T)
    mask = jnp.arange(T)[None, :] < audio_lengths[:, None]
    ref = -jnp.sum(jnp.where(mask, lse_ref, 0.0)) / jnp.sum(audio_lengths)

    # default config: one full-length time tile per batch row
    loss_full = jax.block_until_ready(gmm_loss(x, mu, std, pi, audio_lengths))
    # explicitly tiled config: exercises the multi-step scratch accumulation path
    loss_tiled = jax.block_until_ready(
        gmm_loss(x, mu, std, pi, audio_lengths, t_tile=256))

    assert jnp.allclose(loss_full, ref, rtol=1e-5, atol=1e-5), (float(loss_full), float(ref))
    assert jnp.allclose(loss_tiled, ref, rtol=1e-5, atol=1e-5), (float(loss_tiled), float(ref))
    print("KERNEL_OK")
</pallas_src>

<mosaic_0001>
module attributes {stable_mosaic.version = 11 : i64} {
  func.func @_gmm_loss_kernel(%arg0: i32, %arg1: i32, %arg2: memref<2xi32, #tpu.memory_space<smem>>, %arg3: memref<1x1x1024xf32, #tpu.memory_space<vmem>>, %arg4: memref<1x4x1024xf32, #tpu.memory_space<vmem>>, %arg5: memref<1x4x1024xf32, #tpu.memory_space<vmem>>, %arg6: memref<1x4x1024xf32, #tpu.memory_space<vmem>>, %arg7: memref<1x1x1xf32, #tpu.memory_space<vmem>>, %arg8: memref<1x1x1024xf32, #tpu.memory_space<vmem>>) attributes {dimension_semantics = [#tpu.dimension_semantics<parallel>, #tpu.dimension_semantics<arbitrary>], iteration_bounds = array<i64: 2, 1>, scalar_prefetch = 1 : i64, scratch_operands = 1 : i64, tpu.core_type = #tpu.core_type<tc>, window_params = [{transform_indices = @transform_0, window_bounds = array<i64: 1, 1, 1024>}, {transform_indices = @transform_1, window_bounds = array<i64: 1, 4, 1024>}, {transform_indices = @transform_2, window_bounds = array<i64: 1, 4, 1024>}, {transform_indices = @transform_3, window_bounds = array<i64: 1, 4, 1024>}, {transform_indices = @transform_4, window_bounds = array<i64: 1, 1, 1>}]} {
    %c0_i32 = arith.constant 0 : i32
    %0 = arith.cmpi eq, %arg1, %c0_i32 : i32
    %1 = arith.extui %0 : i1 to i32
    %c0_i32_0 = arith.constant 0 : i32
    %2 = arith.cmpi ne, %1, %c0_i32_0 : i32
    scf.if %2 {
      %cst_27 = arith.constant 0.000000e+00 : f32
      %55 = vector.broadcast %cst_27 : f32 to vector<1x1x1024xf32>
      %c0_28 = arith.constant 0 : index
      %c0_29 = arith.constant 0 : index
      %c0_30 = arith.constant 0 : index
      %56 = vector.load %arg8[%c0_28, %c0_29, %c0_30] : memref<1x1x1024xf32, #tpu.memory_space<vmem>>, vector<1x1x1024xf32>
      tpu.vector_store %arg8[%c0_28, %c0_29, %c0_30], %55 {strides = array<i32>} : memref<1x1x1024xf32, #tpu.memory_space<vmem>>, vector<1x1x1024xf32>,
    } else {
    }
    %c0 = arith.constant 0 : index
    %c0_1 = arith.constant 0 : index
    %c0_2 = arith.constant 0 : index
    %3 = vector.load %arg3[%c0, %c0_1, %c0_2] : memref<1x1x1024xf32, #tpu.memory_space<vmem>>, vector<1x1x1024xf32>
    %c0_3 = arith.constant 0 : index
    %c0_4 = arith.constant 0 : index
    %c0_5 = arith.constant 0 : index
    %4 = vector.load %arg4[%c0_3, %c0_4, %c0_5] : memref<1x4x1024xf32, #tpu.memory_space<vmem>>, vector<1x4x1024xf32>
    %c0_6 = arith.constant 0 : index
    %c0_7 = arith.constant 0 : index
    %c0_8 = arith.constant 0 : index
    %5 = vector.load %arg5[%c0_6, %c0_7, %c0_8] : memref<1x4x1024xf32, #tpu.memory_space<vmem>>, vector<1x4x1024xf32>
    %c0_9 = arith.constant 0 : index
    %c0_10 = arith.constant 0 : index
    %c0_11 = arith.constant 0 : index
    %6 = vector.load %arg6[%c0_9, %c0_10, %c0_11] : memref<1x4x1024xf32, #tpu.memory_space<vmem>>, vector<1x4x1024xf32>
    %7 = vector.broadcast %3 : vector<1x1x1024xf32> to vector<1x4x1024xf32>
    %8 = arith.subf %7, %4 : vector<1x4x1024xf32>
    %cst = arith.constant 0.000000e+00 : f32
    %9 = vector.broadcast %cst : f32 to vector<1x4x1024xf32>
    %10 = arith.subf %9, %5 : vector<1x4x1024xf32>
    %11 = math.exp %10 : vector<1x4x1024xf32>
    %12 = arith.mulf %8, %11 : vector<1x4x1024xf32>
    %cst_12 = arith.constant -5.000000e-01 : f32
    %13 = vector.broadcast %cst_12 : f32 to vector<1x4x1024xf32>
    %14 = arith.mulf %13, %12 : vector<1x4x1024xf32>
    %15 = arith.mulf %14, %12 : vector<1x4x1024xf32>
    %16 = arith.subf %15, %5 : vector<1x4x1024xf32>
    %cst_13 = arith.constant 0.918938517 : f32
    %17 = vector.broadcast %cst_13 : f32 to vector<1x4x1024xf32>
    %18 = arith.subf %16, %17 : vector<1x4x1024xf32>
    %19 = arith.addf %18, %6 : vector<1x4x1024xf32>
    %cst_14 = arith.constant dense<0xFF800000> : vector<1x1024xf32>
    %20 = vector.multi_reduction <maximumf>, %19, %cst_14 [1] : vector<1x4x1024xf32> to vector<1x1024xf32>
    %21 = vector.shape_cast %20 : vector<1x1024xf32> to vector<1x1x1024xf32>
    %22 = vector.broadcast %21 : vector<1x1x1024xf32> to vector<1x4x1024xf32>
    %23 = arith.subf %19, %22 : vector<1x4x1024xf32>
    %24 = math.exp %23 : vector<1x4x1024xf32>
    %cst_15 = arith.constant dense<0.000000e+00> : vector<1x1024xf32>
    %25 = vector.multi_reduction <add>, %24, %cst_15 [1] : vector<1x4x1024xf32> to vector<1x1024xf32>
    %26 = vector.shape_cast %25 : vector<1x1024xf32> to vector<1x1x1024xf32>
    %27 = math.log %26 : vector<1x1x1024xf32>
    %28 = arith.addf %21, %27 : vector<1x1x1024xf32>
    %cst_16 = arith.constant dense<0xFF800000> : vector<1x1024xf32>
    %29 = vector.multi_reduction <maximumf>, %6, %cst_16 [1] : vector<1x4x1024xf32> to vector<1x1024xf32>
    %30 = vector.shape_cast %29 : vector<1x1024xf32> to vector<1x1x1024xf32>
    %31 = vector.broadcast %30 : vector<1x1x1024xf32> to vector<1x4x1024xf32>
    %32 = arith.subf %6, %31 : vector<1x4x1024xf32>
    %33 = math.exp %32 : vector<1x4x1024xf32>
    %cst_17 = arith.constant dense<0.000000e+00> : vector<1x1024xf32>
    %34 = vector.multi_reduction <add>, %33, %cst_17 [1] : vector<1x4x1024xf32> to vector<1x1024xf32>
    %35 = vector.shape_cast %34 : vector<1x1024xf32> to vector<1x1x1024xf32>
    %36 = math.log %35 : vector<1x1x1024xf32>
    %37 = arith.addf %30, %36 : vector<1x1x1024xf32>
    %38 = arith.subf %28, %37 : vector<1x1x1024xf32>
    %c1024_i32 = arith.constant 1024 : i32
    %39 = arith.muli %arg1, %c1024_i32 : i32
    %40 = tpu.iota {dimensions = array<i32: 2>} : vector<1x1x1024xi32>
    %41 = vector.broadcast %39 : i32 to vector<1x1x1024xi32>
    %42 = arith.addi %41, %40 : vector<1x1x1024xi32>
    %43 = arith.index_cast %arg0 : i32 to index
    %44 = memref.load %arg2[%43] : memref<2xi32, #tpu.memory_space<smem>>
    %45 = vector.broadcast %44 : i32 to vector<1x1x1024xi32>
    %46 = arith.cmpi slt, %42, %45 : vector<1x1x1024xi32>
    %cst_18 = arith.constant 0.000000e+00 : f32
    %47 = vector.broadcast %cst_18 : f32 to vector<1x1x1024xf32>
    %48 = arith.select %46, %38, %47 : vector<1x1x1024xi1>, vector<1x1x1024xf32>
    %c0_19 = arith.constant 0 : index
    %c0_20 = arith.constant 0 : index
    %c0_21 = arith.constant 0 : index
    %49 = vector.load %arg8[%c0_19, %c0_20, %c0_21] : memref<1x1x1024xf32, #tpu.memory_space<vmem>>, vector<1x1x1024xf32>
    %50 = arith.addf %49, %48 : vector<1x1x1024xf32>
    %c0_22 = arith.constant 0 : index
    %c0_23 = arith.constant 0 : index
    %c0_24 = arith.constant 0 : index
    %51 = vector.load %arg8[%c0_22, %c0_23, %c0_24] : memref<1x1x1024xf32, #tpu.memory_space<vmem>>, vector<1x1x1024xf32>
    tpu.vector_store %arg8[%c0_22, %c0_23, %c0_24], %50 {strides = array<i32>} : memref<1x1x1024xf32, #tpu.memory_space<vmem>>, vector<1x1x1024xf32>,
    %c0_i32_25 = arith.constant 0 : i32
    %52 = arith.cmpi eq, %arg1, %c0_i32_25 : i32
    %53 = arith.extui %52 : i1 to i32
    %c0_i32_26 = arith.constant 0 : i32
    %54 = arith.cmpi ne, %53, %c0_i32_26 : i32
    scf.if %54 {
      %c0_27 = arith.constant 0 : index
      %c0_28 = arith.constant 0 : index
      %c0_29 = arith.constant 0 : index
      %55 = vector.load %arg8[%c0_27, %c0_28, %c0_29] : memref<1x1x1024xf32, #tpu.memory_space<vmem>>, vector<1x1x1024xf32>
      %cst_30 = arith.constant dense<0.000000e+00> : vector<1x1xf32>
      %56 = vector.multi_reduction <add>, %55, %cst_30 [2] : vector<1x1x1024xf32> to vector<1x1xf32>
      %57 = vector.shape_cast %56 : vector<1x1xf32> to vector<1x1x1xf32>
      %c0_31 = arith.constant 0 : index
      %c0_32 = arith.constant 0 : index
      %c0_33 = arith.constant 0 : index
      %58 = vector.load %arg7[%c0_31, %c0_32, %c0_33] : memref<1x1x1xf32, #tpu.memory_space<vmem>>, vector<1x1x1xf32>
      tpu.vector_store %arg7[%c0_31, %c0_32, %c0_33], %57 {strides = array<i32>} : memref<1x1x1xf32, #tpu.memory_space<vmem>>, vector<1x1x1xf32>,
    } else {
    }
    return
  }
  func.func @transform_0(%arg0: i32, %arg1: i32, %arg2: memref<2xi32, #tpu.memory_space<smem>>) -> (i32, i32, i32) {
    %c0_i32 = arith.constant 0 : i32
    %c0_i32_0 = arith.constant 0 : i32
    return %arg0, %c0_i32, %arg1 : i32, i32, i32
  }
  func.func @transform_1(%arg0: i32, %arg1: i32, %arg2: memref<2xi32, #tpu.memory_space<smem>>) -> (i32, i32, i32) {
    %c0_i32 = arith.constant 0 : i32
    %c0_i32_0 = arith.constant 0 : i32
    return %arg0, %c0_i32, %arg1 : i32, i32, i32
  }
  func.func @transform_2(%arg0: i32, %arg1: i32, %arg2: memref<2xi32, #tpu.memory_space<smem>>) -> (i32, i32, i32) {
    %c0_i32 = arith.constant 0 : i32
    %c0_i32_0 = arith.constant 0 : i32
    return %arg0, %c0_i32, %arg1 : i32, i32, i32
  }
  func.func @transform_3(%arg0: i32, %arg1: i32, %arg2: memref<2xi32, #tpu.memory_space<smem>>) -> (i32, i32, i32) {
    %c0_i32 = arith.constant 0 : i32
    %c0_i32_0 = arith.constant 0 : i32
    return %arg0, %c0_i32, %arg1 : i32, i32, i32
  }
  func.func @transform_4(%arg0: i32, %arg1: i32, %arg2: memref<2xi32, #tpu.memory_space<smem>>) -> (i32, i32, i32) {
    %c0_i32 = arith.constant 0 : i32
    %c0_i32_0 = arith.constant 0 : i32
    %c0_i32_1 = arith.constant 0 : i32
    return %arg0, %c0_i32, %c0_i32_0 : i32, i32, i32
  }
}

</mosaic_0001>

<llo_original>
// kernel: tpu_custom_call.1
$region0: #{tpu_custom_call.1}
  #allocation0 [shape = 'u32[]', space=smem, size = 0x4, offset = 0x4, fixed_abs, tag = 'smem constant byte address 0x4 - core index']
  #allocation1 [shape = 'u32[144,128]{1,0:T(1,128)}', space=vmem, size = 0x12000, scoped, tag = 'internal scratch']
  #allocation2 [shape = 'f32[1,1,1024]{2,1,0:T(1,128)}', space=vmem, size = 0x1000, scoped, tag = 'scratch operand']
  #allocation3 [shape = 's32[1]{0}', space=sflag, size = 0x4, scoped, tag = 'scoped memory for tpu_custom_call.1']
  #allocation4 [shape = 'u8[512]{0}', space=smem, size = 0x200, scoped, tag = 'prefetched SMEM operand 0']
  %s0 = inlined_call_operand.hbm [shape: s32[2], index: 0, kind: input, shape index: {}]
  %s1 = inlined_call_operand.hbm [shape: f32[2,1,1024], index: 1, kind: input, shape index: {}]
  %s2 = inlined_call_operand.hbm [shape: f32[2,4,1024], index: 2, kind: input, shape index: {}]
  %s3 = inlined_call_operand.hbm [shape: f32[2,4,1024], index: 3, kind: input, shape index: {}]
  %s4 = inlined_call_operand.hbm [shape: f32[2,4,1024], index: 4, kind: input, shape index: {}]
  %s5 = inlined_call_operand.vmem [shape: f32[2,1,1], index: 5, kind: output, shape index: {}]
  %s6 = sld [smem:[#allocation0]]
  $region73: #{tpu_custom_call.1} parent=0
    _
  %s8 = ssub.s32 1, %s6
  %s9 = scalar_select 0, %s8, %s6
  %11 = dma.hbm_to_smem %s0, 16, [#allocation4], [#allocation3]
  %12 = dma.done [#allocation3], 16
  %13 = sfence
  $region1: #{tpu_custom_call.1} parent=0
    #allocation5 [shape = 'u8[8192]{0}', space=vmem, size = 0x2000, scoped, tag = 'input window, operand 1']
    #allocation6 [shape = 's32[2]{0}', space=sflag, size = 0x8, scoped, tag = 'scoped memory for tpu_custom_call.1']
    #allocation7 [shape = 'u8[32768]{0}', space=vmem, size = 0x8000, scoped, tag = 'input window, operand 2']
    #allocation8 [shape = 's32[2]{0}', space=sflag, size = 0x8, scoped, tag = 'scoped memory for tpu_custom_call.1']
    #allocation9 [shape = 'u8[32768]{0}', space=vmem, size = 0x8000, scoped, tag = 'input window, operand 3']
    #allocation10 [shape = 'u8[32768]{0}', space=vmem, size = 0x8000, scoped, tag = 'input window, operand 4']
    #allocation11 [shape = 's32[2]{0}', space=sflag, size = 0x8, scoped, tag = 'scoped memory for tpu_custom_call.1']
    %14 = vsyncpa [#allocation6], 0
    %s15 = scalar_lea.sflag [#allocation6], 1
    %16 = vsyncpa %s15, 0
    %17 = vsyncpa [#allocation8], 0
    %s18 = scalar_lea.sflag [#allocation8], 1
    %19 = vsyncpa %s18, 0
    %20 = vsyncpa [#allocation11], 0
    %s21 = scalar_lea.sflag [#allocation11], 1
    %22 = vsyncpa %s21, 0
    loop: start=0, step=1, limit=4
    $region2: #{tpu_custom_call.1} parent=1 // loop_pre_header
      _
    $region3: #{tpu_custom_call.1} parent=1 // loop_header
      %s24 = sphi 0, %s28
      %p25 = scmp.ge.s32.totalorder %s24, 4
      %s31 = sphi 0, %s43
      %s32 = sphi 0, %s39
      %s33 = sphi 0, %s31
      %s34 = sphi 0, %s32
      %s35 = sphi 0, %s33
      %s36 = sphi 0, %s34
      %s48 = sphi 0, %s50
      %s51 = sphi 0, %s48
      %s52 = sphi 0, %s51
      %s68 = sphi 0, %s52
      %s76 = sphi 0, %s78
      %s79 = sphi 0, %s76
      %s80 = sphi 0, %s79
      %s96 = sphi 0, %s80
      %s104 = sphi 0, %s106
      %s107 = sphi 0, %s104
      %s108 = sphi 0, %s107
      %s124 = sphi 0, %s108
      %s132 = sphi 0, %s134
      %s135 = sphi 0, %s132
      %s136 = sphi 0, %s135
      %s152 = sphi 0, %s136
      %s158 = sphi 0, %s160
      %s161 = sphi 0, %s158
      %s162 = sphi 0, %s161
      %s178 = sphi 0, %s162
    $region4: #{tpu_custom_call.1} parent=1 // loop_header_branch
      %27 = sbr.rel (%p25) target = $region8
    $region5: #{tpu_custom_call.1} parent=1 // loop_body
      %s29 = ssub.s32 %s24, 1
      %s30 = ssub.s32 %s24, 2
      %s37 = sadd.s32 1, %s32
      %p38 = scmp.ge.s32.totalorder %s37, 1
      %s39 = scalar_select %p38, 0, %s37
      %s40 = sadd.s32 1, %s31
      %s41 = scalar_select %p38, %s40, %s31
      %p42 = scmp.ge.s32.totalorder %s41, 2
      %s43 = scalar_select %p42, 0, %s41
      %s44 = ssub.s32 %s31, %s43
      %s45 = ssub.s32 %s32, %s39
      %s46 = sor.u32 %s44, %s45
      %p47 = scmp.eq.s32.totalorder %s46, 0
      %s49 = sadd.s32 %s48, 1
      %s50 = scalar_select %p47, %s48, %s49
      %p53 = pneg %p47
      %p54 = scmp.eq.s32.totalorder %s24, 1
      %p55 = por %p53, %p54
      %p56 = scmp.ne.s32.totalorder %s48, %s51
      %p57 = scmp.eq.s32.totalorder %s24, 0
      %p58 = por %p56, %p57
      %p59 = scmp.ne.s32.totalorder %s48, %s51
      %p60 = scmp.eq.s32.totalorder %s29, 1
      %p61 = por %p59, %p60
      %p62 = scmp.ne.s32.totalorder %s51, %s52
      %p63 = scmp.eq.s32.totalorder %s29, 0
      %p64 = por %p62, %p63
      %p65 = scmp.ne.s32.totalorder %s51, %s52
      %p66 = scmp.eq.s32.totalorder %s30, 1
      %p67 = por %p65, %p66
      %p69 = scmp.ne.s32.totalorder %s52, %s68
      %p70 = scmp.eq.s32.totalorder %s30, 0
      %p71 = por %p69, %p70
      %s72 = ssub.s32 %s31, %s43
      %s73 = ssub.s32 %s32, %s39
      %s74 = sor.u32 %s72, %s73
      %p75 = scmp.eq.s32.totalorder %s74, 0
      %s77 = sadd.s32 %s76, 1
      %s78 = scalar_select %p75, %s76, %s77
      %p81 = pneg %p75
      %p82 = scmp.eq.s32.totalorder %s24, 1
      %p83 = por %p81, %p82
      %p84 = scmp.ne.s32.totalorder %s76, %s79
      %p85 = scmp.eq.s32.totalorder %s24, 0
      %p86 = por %p84, %p85
      %p87 = scmp.ne.s32.totalorder %s76, %s79
      %p88 = scmp.eq.s32.totalorder %s29, 1
      %p89 = por %p87, %p88
      %p90 = scmp.ne.s32.totalorder %s79, %s80
      %p91 = scmp.eq.s32.totalorder %s29, 0
      %p92 = por %p90, %p91
      %p93 = scmp.ne.s32.totalorder %s79, %s80
      %p94 = scmp.eq.s32.totalorder %s30, 1
      %p95 = por %p93, %p94
      %p97 = scmp.ne.s32.totalorder %s80, %s96
      %p98 = scmp.eq.s32.totalorder %s30, 0
      %p99 = por %p97, %p98
      %s100 = ssub.s32 %s31, %s43
      %s101 = ssub.s32 %s32, %s39
      %s102 = sor.u32 %s100, %s101
      %p103 = scmp.eq.s32.totalorder %s102, 0
      %s105 = sadd.s32 %s104, 1
      %s106 = scalar_select %p103, %s104, %s105
      %p109 = pneg %p103
      %p110 = scmp.eq.s32.totalorder %s24, 1
      %p111 = por %p109, %p110
      %p112 = scmp.ne.s32.totalorder %s104, %s107
      %p113 = scmp.eq.s32.totalorder %s24, 0
      %p114 = por %p112, %p113
      %p115 = scmp.ne.s32.totalorder %s104, %s107
      %p116 = scmp.eq.s32.totalorder %s29, 1
      %p117 = por %p115, %p116
      %p118 = scmp.ne.s32.totalorder %s107, %s108
      %p119 = scmp.eq.s32.totalorder %s29, 0
      %p120 = por %p118, %p119
      %p121 = scmp.ne.s32.totalorder %s107, %s108
      %p122 = scmp.eq.s32.totalorder %s30, 1
      %p123 = por %p121, %p122
      %p125 = scmp.ne.s32.totalorder %s108, %s124
      %p126 = scmp.eq.s32.totalorder %s30, 0
      %p127 = por %p125, %p126
      %s128 = ssub.s32 %s31, %s43
      %s129 = ssub.s32 %s32, %s39
      %s130 = sor.u32 %s128, %s129
      %p131 = scmp.eq.s32.totalorder %s130, 0
      %s133 = sadd.s32 %s132, 1
      %s134 = scalar_select %p131, %s132, %s133
      %p137 = pneg %p131
      %p138 = scmp.eq.s32.totalorder %s24, 1
      %p139 = por %p137, %p138
      %p140 = scmp.ne.s32.totalorder %s132, %s135
      %p141 = scmp.eq.s32.totalorder %s24, 0
      %p142 = por %p140, %p141
      %p143 = scmp.ne.s32.totalorder %s132, %s135
      %p144 = scmp.eq.s32.totalorder %s29, 1
      %p145 = por %p143, %p144
      %p146 = scmp.ne.s32.totalorder %s135, %s136
      %p147 = scmp.eq.s32.totalorder %s29, 0
      %p148 = por %p146, %p147
      %p149 = scmp.ne.s32.totalorder %s135, %s136
      %p150 = scmp.eq.s32.totalorder %s30, 1
      %p151 = por %p149, %p150
      %p153 = scmp.ne.s32.totalorder %s136, %s152
      %p154 = scmp.eq.s32.totalorder %s30, 0
      %p155 = por %p153, %p154
      %s156 = ssub.s32 %s31, %s43
      %p157 = scmp.eq.s32.totalorder %s156, 0
      %s159 = sadd.s32 %s158, 1
      %s160 = scalar_select %p157, %s158, %s159
      %p163 = pneg %p157
      %p164 = scmp.eq.s32.totalorder %s24, 1
      %p165 = por %p163, %p164
      %p166 = scmp.ne.s32.totalorder %s158, %s161
      %p167 = scmp.eq.s32.totalorder %s24, 0
      %p168 = por %p166, %p167
      %p169 = scmp.ne.s32.totalorder %s158, %s161
      %p170 = scmp.eq.s32.totalorder %s29, 1
      %p171 = por %p169, %p170
      %p172 = scmp.ne.s32.totalorder %s161, %s162
      %p173 = scmp.eq.s32.totalorder %s29, 0
      %p174 = por %p172, %p173
      %p175 = scmp.ne.s32.totalorder %s161, %s162
      %p176 = scmp.eq.s32.totalorder %s30, 1
      %p177 = por %p175, %p176
      %p179 = scmp.ne.s32.totalorder %s162, %s178
      %p180 = scmp.eq.s32.totalorder %s30, 0
      %p181 = por %p179, %p180
      %p182 = scmp.le.s32.totalorder 1, %s24
      %p183 = scmp.lt.s32.totalorder %s24, 3
      %p184 = pnand %p182, %p183
      %p185 = pneg %p184
      // Predicated region
      $region9: #{tpu_custom_call.1} parent=5 // pred_check
        _
      $region10: #{tpu_custom_call.1} parent=5 // pred_check_branch
        %187 = sbr.rel (%p184) target = $region12
      $region11: #{tpu_custom_call.1} parent=5 // pred_region
        %s188 = ssub.s32 %s24, 1
      $region12: #{tpu_custom_call.1} parent=5 // pred_fallthru
        _
      %p189 = scmp.lt.s32.totalorder %s24, 2
      // Predicated region
      $region13: #{tpu_custom_call.1} parent=5 // pred_check
        %p190 = pneg %p189
      $region14: #{tpu_custom_call.1} parent=5 // pred_check_branch
        %192 = sbr.rel (%p190) target = $region16
      $region15: #{tpu_custom_call.1} parent=5 // pred_region
        // Predicated region
        $region17: #{tpu_custom_call.1} parent=15 // pred_check
          %p193 = pneg %p58
        $region18: #{tpu_custom_call.1} parent=15 // pred_check_branch
          %195 = sbr.rel (%p193) target = $region20
        $region19: #{tpu_custom_call.1} parent=15 // pred_region
          %s196 = sand.u32 %s48, 1
          %s197 = scalar_lea.sflag [#allocation6], %s196
          %s198 = sand.u32 %s48, 1
          %s199 = smul.addr %s198, 8
          %s200 = scalar_lea.vmem [#allocation5], %s199
          %s201 = smul.u32 8, %s32
          %s203 = ssub.s32 128, 128
          %204 = vsyncadd %s197, %s203
          %s205 = smul.addr %s31, 8
          %s206 = sadd.s32 %s201, %s205
          %s207 = smul.addr %s206, 16
          %s208 = scalar_lea.hbm %s1, %s207
          %s210 = sshll.u32 %s200, 4
          %s211 = int_to_ptr.vmem [resolvable:$true] %s210
          %213 = dma.hbm_to_vmem [thread:$0]  %s208, 128, %s211, %s197
        $region20: #{tpu_custom_call.1} parent=15 // pred_fallthru
          _
        // Predicated region
        $region21: #{tpu_custom_call.1} parent=15 // pred_check
          %p214 = pneg %p86
        $region22: #{tpu_custom_call.1} parent=15 // pred_check_branch
          %216 = sbr.rel (%p214) target = $region24
        $region23: #{tpu_custom_call.1} parent=15 // pred_region
          %s217 = sand.u32 %s24, 1
          %s218 = scalar_lea.sflag [#allocation8], %s217
          %s219 = sand.u32 %s76, 1
          %s220 = smul.addr %s219, 32
          %s221 = scalar_lea.vmem [#allocation7], %s220
          %s222 = smul.u32 8, %s32
          %s224 = ssub.s32 512, 512
          %225 = vsyncadd %s218, %s224
          %s226 = smul.addr %s31, 8
          %s227 = sadd.s32 %s222, %s226
          %s228 = smul.addr %s227, 64
          %s229 = scalar_lea.hbm %s2, %s228
          %s231 = sshll.u32 %s221, 4
          %s232 = int_to_ptr.vmem [resolvable:$true] %s231
          %234 = dma.hbm_to_vmem [thread:$0]  %s229, 512, %s232, %s218
        $region24: #{tpu_custom_call.1} parent=15 // pred_fallthru
          _
        // Predicated region
        $region25: #{tpu_custom_call.1} parent=15 // pred_check
          %p235 = pneg %p114
        $region26: #{tpu_custom_call.1} parent=15 // pred_check_branch
          %237 = sbr.rel (%p235) target = $region28
        $region27: #{tpu_custom_call.1} parent=15 // pred_region
          %s238 = sand.u32 %s24, 1
          %s239 = scalar_lea.sflag [#allocation8], %s238
          %s240 = sand.u32 %s104, 1
          %s241 = smul.addr %s240, 32
          %s242 = scalar_lea.vmem [#allocation9], %s241
          %s243 = smul.u32 8, %s32
          %s245 = ssub.s32 512, 512
          %246 = vsyncadd %s239, %s245
          %s247 = smul.addr %s31, 8
          %s248 = sadd.s32 %s243, %s247
          %s249 = smul.addr %s248, 64
          %s250 = scalar_lea.hbm %s3, %s249
          %s252 = sshll.u32 %s242, 4
          %s253 = int_to_ptr.vmem [resolvable:$true] %s252
          %255 = dma.hbm_to_vmem [thread:$0]  %s250, 512, %s253, %s239
        $region28: #{tpu_custom_call.1} parent=15 // pred_fallthru
          _
        // Predicated region
        $region29: #{tpu_custom_call.1} parent=15 // pred_check
          %p256 = pneg %p142
        $region30: #{tpu_custom_call.1} parent=15 // pred_check_branch
          %258 = sbr.rel (%p256) target = $region32
        $region31: #{tpu_custom_call.1} parent=15 // pred_region
          %s259 = sand.u32 %s132, 1
          %s260 = scalar_lea.sflag [#allocation11], %s259
          %s261 = sand.u32 %s132, 1
          %s262 = smul.addr %s261, 32
          %s263 = scalar_lea.vmem [#allocation10], %s262
          %s264 = smul.u32 8, %s32
          %s266 = ssub.s32 512, 512
          %267 = vsyncadd %s260, %s266
          %s268 = smul.addr %s31, 8
          %s269 = sadd.s32 %s264, %s268
          %s270 = smul.addr %s269, 64
          %s271 = scalar_lea.hbm %s4, %s270
          %s273 = sshll.u32 %s263, 4
          %s274 = int_to_ptr.vmem [resolvable:$true] %s273
          %276 = dma.hbm_to_vmem [thread:$0]  %s271, 512, %s274, %s260
        $region32: #{tpu_custom_call.1} parent=15 // pred_fallthru
          _
      $region16: #{tpu_custom_call.1} parent=5 // pred_fallthru
        _
      %p277 = scmp.le.s32.totalorder 1, %s24
      %p278 = scmp.lt.s32.totalorder %s24, 3
      %p279 = pnand %p277, %p278
      %p280 = pneg %p279
      // Predicated region
      $region33: #{tpu_custom_call.1} parent=5 // pred_check
        _
      $region34: #{tpu_custom_call.1} parent=5 // pred_check_branch
        %282 = sbr.rel (%p279) target = $region36
      $region35: #{tpu_custom_call.1} parent=5 // pred_region
        %s283 = ssub.s32 %s24, 1
        %s284 = sand.u32 %s51, 1
        %s285 = scalar_lea.sflag [#allocation6], %s284
        %s286 = sand.u32 %s51, 1
        %s287 = smul.addr %s286, 8
        %s288 = scalar_lea.vmem [#allocation5], %s287
        // Predicated region
        $region37: #{tpu_custom_call.1} parent=35 // pred_check
          %p289 = pneg %p64
        $region38: #{tpu_custom_call.1} parent=35 // pred_check_branch
          %291 = sbr.rel (%p289) target = $region40
        $region39: #{tpu_custom_call.1} parent=35 // pred_region
          %292 = dma.done %s285, 128
        $region40: #{tpu_custom_call.1} parent=35 // pred_fallthru
          _
        %s293 = sand.u32 %s29, 1
        %s294 = scalar_lea.sflag [#allocation8], %s293
        %s295 = sand.u32 %s79, 1
        %s296 = smul.addr %s295, 32
        %s297 = scalar_lea.vmem [#allocation7], %s296
        // Predicated region
        $region41: #{tpu_custom_call.1} parent=35 // pred_check
          %p298 = pneg %p92
        $region42: #{tpu_custom_call.1} parent=35 // pred_check_branch
          %300 = sbr.rel (%p298) target = $region44
        $region43: #{tpu_custom_call.1} parent=35 // pred_region
          %301 = dma.done %s294, 512
        $region44: #{tpu_custom_call.1} parent=35 // pred_fallthru
          _
        %s302 = sand.u32 %s29, 1
        %s303 = scalar_lea.sflag [#allocation8], %s302
        %s304 = sand.u32 %s107, 1
        %s305 = smul.addr %s304, 32
        %s306 = scalar_lea.vmem [#allocation9], %s305
        // Predicated region
        $region45: #{tpu_custom_call.1} parent=35 // pred_check
          %p307 = pneg %p120
        $region46: #{tpu_custom_call.1} parent=35 // pred_check_branch
          %309 = sbr.rel (%p307) target = $region48
        $region47: #{tpu_custom_call.1} parent=35 // pred_region
          %310 = dma.done %s303, 512
        $region48: #{tpu_custom_call.1} parent=35 // pred_fallthru
          _
        %s311 = sand.u32 %s135, 1
        %s312 = scalar_lea.sflag [#allocation11], %s311
        %s313 = sand.u32 %s135, 1
        %s314 = smul.addr %s313, 32
        %s315 = scalar_lea.vmem [#allocation10], %s314
        // Predicated region
        $region49: #{tpu_custom_call.1} parent=35 // pred_check
          %p316 = pneg %p148
        $region50: #{tpu_custom_call.1} parent=35 // pred_check_branch
          %318 = sbr.rel (%p316) target = $region52
        $region51: #{tpu_custom_call.1} parent=35 // pred_region
          %319 = dma.done %s312, 512
        $region52: #{tpu_custom_call.1} parent=35 // pred_fallthru
          _
        %s320 = sand.u32 %s51, 1
        %s321 = scalar_lea.sflag [#allocation6], %s320
        %s322 = sand.u32 %s51, 1
        %s323 = smul.addr %s322, 8
        %s324 = scalar_lea.vmem [#allocation5], %s323
        %p325 = pneg %p64
        %p326 = pneg %p61
        %s327 = sand.u32 %s29, 1
        %s328 = scalar_lea.sflag [#allocation8], %s327
        %s329 = sand.u32 %s79, 1
        %s330 = smul.addr %s329, 32
        %s331 = scalar_lea.vmem [#allocation7], %s330
        %p332 = pneg %p92
        %p333 = pneg %p89
        %s334 = sand.u32 %s29, 1
        %s335 = scalar_lea.sflag [#allocation8], %s334
        %s336 = sand.u32 %s107, 1
        %s337 = smul.addr %s336, 32
        %s338 = scalar_lea.vmem [#allocation9], %s337
        %p339 = pneg %p120
        %p340 = pneg %p117
        %s341 = sand.u32 %s135, 1
        %s342 = scalar_lea.sflag [#allocation11], %s341
        %s343 = sand.u32 %s135, 1
        %s344 = smul.addr %s343, 32
        %s345 = scalar_lea.vmem [#allocation10], %s344
        %p346 = pneg %p148
        %p347 = pneg %p145
        %p348 = pneg %p174
        %p349 = pneg %p171
        %p350 = scmp.lt.s32.totalorder %s33, 1
        %s351 = scalar_select %p350, %s33, 1
        %s352 = scalar_lea.vmem %s5, %s351
        %s353 = smul.u32 8, %s34
        %s354 = smul.u32 8, %s34
        %s355 = smul.u32 8, %s34
        %s356 = smul.u32 8, %s34
        %p357 = scmp.lt.s32.totalorder %s33, 1
        %s358 = scalar_select %p357, %s33, 1
        %s359 = scalar_lea.vmem %s5, %s358
        %p360 = scmp.eq.s32.totalorder %s34, 0
        // Predicated region
        $region53: #{tpu_custom_call.1} parent=35 // pred_check
          %p361 = pneg %p360
        $region54: #{tpu_custom_call.1} parent=35 // pred_check_branch
          %363 = sbr.rel (%p361) target = $region56
        $region55: #{tpu_custom_call.1} parent=35 // pred_region
          %364 = vst [vmem:[#allocation2] sm:$0xff] 0.0
        $region56: #{tpu_custom_call.1} parent=35 // pred_fallthru
          _
        %v365 = vld [vmem:[%s288] sm:$0xff]
        %v366 = vld [vmem:[%s297] sm:$0xff]
        %v367 = vld [vmem:[%s297 + $0x8] sm:$0xff]
        %v368 = vld [vmem:[%s297 + $0x10] sm:$0xff]
        %v369 = vld [vmem:[%s297 + $0x18] sm:$0xff]
        %v370 = vld [vmem:[%s306] sm:$0xff]
        %v371 = vld [vmem:[%s306 + $0x8] sm:$0xff]
        %v372 = vld [vmem:[%s306 + $0x10] sm:$0xff]
        %v373 = vld [vmem:[%s306 + $0x18] sm:$0xff]
        %v374 = vld [vmem:[%s315] sm:$0xff]
        %v375 = vld [vmem:[%s315 + $0x8] sm:$0xff]
        %v376 = vld [vmem:[%s315 + $0x10] sm:$0xff]
        %v377 = vld [vmem:[%s315 + $0x18] sm:$0xff]
        %v379 = vlaneseq
        %v380 = vshrl.u32 %v379, 7
        %v381 = vsub.s32 0, %v380
        %v382 = vrot.slane %v365, %v381
        %v383 = vlaneseq
        %v384 = vshrl.u32 %v383, 7
        %v385 = vsub.s32 1, %v384
        %v386 = vrot.slane %v365, %v385
        %v387 = vlaneseq
        %v388 = vshrl.u32 %v387, 7
        %v389 = vsub.s32 2, %v388
        %v390 = vrot.slane %v365, %v389
        %v391 = vlaneseq
        %v392 = vshrl.u32 %v391, 7
        %v393 = vsub.s32 3, %v392
        %v394 = vrot.slane %v365, %v393
        %v395 = vlaneseq
        %v396 = vshrl.u32 %v395, 7
        %v397 = vsub.s32 4, %v396
        %v398 = vrot.slane %v365, %v397
        %v399 = vlaneseq
        %v400 = vshrl.u32 %v399, 7
        %v401 = vsub.s32 5, %v400
        %v402 = vrot.slane %v365, %v401
        %v403 = vlaneseq
        %v404 = vshrl.u32 %v403, 7
        %v405 = vsub.s32 6, %v404
        %v406 = vrot.slane %v365, %v405
        %v407 = vlaneseq
        %v408 = vshrl.u32 %v407, 7
        %v409 = vsub.s32 7, %v408
        %v410 = vrot.slane %v365, %v409
        %v423 = vcombine.high %v366, %v366
        %v424 = vcombine.high %v367, %v367
        %v425 = vcombine.high %v368, %v368
        %v426 = vcombine.high %v369, %v369
        %v431 = vsub.f32 %v382, %v366
        %v432 = vsub.f32 %v386, %v423
        %v433 = vsub.f32 %v390, %v367
        %v434 = vsub.f32 %v394, %v424
        %v435 = vsub.f32 %v398, %v368
        %v436 = vsub.f32 %v402, %v425
        %v437 = vsub.f32 %v406, %v369
        %v438 = vsub.f32 %v410, %v426
        %v439 = vsub.f32 0.0, %v370
        %v440 = vsub.f32 0.0, %v371
        %v441 = vsub.f32 0.0, %v372
        %v442 = vsub.f32 0.0, %v373
        %v443 = vmul.f32 %v439, 1.442695
        %v444 = vpow.pop %v443
        %v445 = vmul.f32 %v440, 1.442695
        %v446 = vpow.pop %v445
        %v447 = vmul.f32 %v441, 1.442695
        %v448 = vpow.pop %v447
        %v449 = vmul.f32 %v442, 1.442695
        %v450 = vpow.pop %v449
        %v455 = vcombine.high %v444, %v444
        %v456 = vcombine.high %v446, %v446
        %v457 = vcombine.high %v448, %v448
        %v458 = vcombine.high %v450, %v450
        %v463 = vmul.f32 %v431, %v444
        %v464 = vmul.f32 %v432, %v455
        %v465 = vmul.f32 %v433, %v446
        %v466 = vmul.f32 %v434, %v456
        %v467 = vmul.f32 %v435, %v448
        %v468 = vmul.f32 %v436, %v457
        %v469 = vmul.f32 %v437, %v450
        %v470 = vmul.f32 %v438, %v458
        %v471 = vmul.f32 %v463, -0.5
        %v472 = vmul.f32 %v464, -0.5
        %v473 = vmul.f32 %v465, -0.5
        %v474 = vmul.f32 %v466, -0.5
        %v475 = vmul.f32 %v467, -0.5
        %v476 = vmul.f32 %v468, -0.5
        %v477 = vmul.f32 %v469, -0.5
        %v478 = vmul.f32 %v470, -0.5
        %v479 = vmul.f32 %v471, %v463
        %v480 = vmul.f32 %v472, %v464
        %v481 = vmul.f32 %v473, %v465
        %v482 = vmul.f32 %v474, %v466
        %v483 = vmul.f32 %v475, %v467
        %v484 = vmul.f32 %v476, %v468
        %v485 = vmul.f32 %v477, %v469
        %v486 = vmul.f32 %v478, %v470
        %v491 = vcombine.high %v370, %v370
        %v492 = vcombine.high %v371, %v371
        %v493 = vcombine.high %v372, %v372
        %v494 = vcombine.high %v373, %v373
        %v499 = vsub.f32 %v479, %v370
        %v500 = vsub.f32 %v480, %v491
        %v501 = vsub.f32 %v481, %v371
        %v502 = vsub.f32 %v482, %v492
        %v503 = vsub.f32 %v483, %v372
        %v504 = vsub.f32 %v484, %v493
        %v505 = vsub.f32 %v485, %v373
        %v506 = vsub.f32 %v486, %v494
        %v507 = vsub.f32 %v499, 0.9189385
        %v508 = vsub.f32 %v500, 0.9189385
        %v509 = vsub.f32 %v501, 0.9189385
        %v510 = vsub.f32 %v502, 0.9189385
        %v511 = vsub.f32 %v503, 0.9189385
        %v512 = vsub.f32 %v504, 0.9189385
        %v513 = vsub.f32 %v505, 0.9189385
        %v514 = vsub.f32 %v506, 0.9189385
        %v519 = vcombine.high %v374, %v374
        %v520 = vcombine.high %v375, %v375
        %v521 = vcombine.high %v376, %v376
        %v522 = vcombine.high %v377, %v377
        %v527 = vadd.f32 %v507, %v374
        %v528 = vadd.f32 %v508, %v519
        %v529 = vadd.f32 %v509, %v375
        %v530 = vadd.f32 %v510, %v520
        %v531 = vadd.f32 %v511, %v376
        %v532 = vadd.f32 %v512, %v521
        %v533 = vadd.f32 %v513, %v377
        %v534 = vadd.f32 %v514, %v522
        %vm535 = vcmask 1043456
        %v536 = vsel %vm535, %v527, -inf
        %v537 = vrot.slane %v536, 4
        %v538 = vmax.f32 %v536, %v537
        %v539 = vrot.slane %v538, 2
        %v540 = vmax.f32 %v538, %v539
        %v541 = vrot.slane %v540, 1
        %v542 = vmax.f32 %v540, %v541
        %v543 = vsel %vm535, %v528, -inf
        %v544 = vrot.slane %v543, 4
        %v545 = vmax.f32 %v543, %v544
        %v546 = vrot.slane %v545, 2
        %v547 = vmax.f32 %v545, %v546
        %v548 = vrot.slane %v547, 1
        %v549 = vmax.f32 %v547, %v548
        %v550 = vsel %vm535, %v529, -inf
        %v551 = vrot.slane %v550, 4
        %v552 = vmax.f32 %v550, %v551
        %v553 = vrot.slane %v552, 2
        %v554 = vmax.f32 %v552, %v553
        %v555 = vrot.slane %v554, 1
        %v556 = vmax.f32 %v554, %v555
        %v557 = vsel %vm535, %v530, -inf
        %v558 = vrot.slane %v557, 4
        %v559 = vmax.f32 %v557, %v558
        %v560 = vrot.slane %v559, 2
        %v561 = vmax.f32 %v559, %v560
        %v562 = vrot.slane %v561, 1
        %v563 = vmax.f32 %v561, %v562
        %v564 = vsel %vm535, %v531, -inf
        %v565 = vrot.slane %v564, 4
        %v566 = vmax.f32 %v564, %v565
        %v567 = vrot.slane %v566, 2
        %v568 = vmax.f32 %v566, %v567
        %v569 = vrot.slane %v568, 1
        %v570 = vmax.f32 %v568, %v569
        %v571 = vsel %vm535, %v532, -inf
        %v572 = vrot.slane %v571, 4
        %v573 = vmax.f32 %v571, %v572
        %v574 = vrot.slane %v573, 2
        %v575 = vmax.f32 %v573, %v574
        %v576 = vrot.slane %v575, 1
        %v577 = vmax.f32 %v575, %v576
        %v578 = vsel %vm535, %v533, -inf
        %v579 = vrot.slane %v578, 4
        %v580 = vmax.f32 %v578, %v579
        %v581 = vrot.slane %v580, 2
        %v582 = vmax.f32 %v580, %v581
        %v583 = vrot.slane %v582, 1
        %v584 = vmax.f32 %v582, %v583
        %v585 = vsel %vm535, %v534, -inf
        %v586 = vrot.slane %v585, 4
        %v587 = vmax.f32 %v585, %v586
        %v588 = vrot.slane %v587, 2
        %v589 = vmax.f32 %v587, %v588
        %v590 = vrot.slane %v589, 1
        %v591 = vmax.f32 %v589, %v590
        %v592 = vsub.f32 %v527, %v542
        %v593 = vsub.f32 %v528, %v549
        %v594 = vsub.f32 %v529, %v556
        %v595 = vsub.f32 %v530, %v563
        %v596 = vsub.f32 %v531, %v570
        %v597 = vsub.f32 %v532, %v577
        %v598 = vsub.f32 %v533, %v584
        %v599 = vsub.f32 %v534, %v591
        %v600 = vmul.f32 %v592, 1.442695
        %v601 = vpow.pop %v600
        %v602 = vmul.f32 %v593, 1.442695
        %v603 = vpow.pop %v602
        %v604 = vmul.f32 %v594, 1.442695
        %v605 = vpow.pop %v604
        %v606 = vmul.f32 %v595, 1.442695
        %v607 = vpow.pop %v606
        %v608 = vmul.f32 %v596, 1.442695
        %v609 = vpow.pop %v608
        %v610 = vmul.f32 %v597, 1.442695
        %v611 = vpow.pop %v610
        %v612 = vmul.f32 %v598, 1.442695
        %v613 = vpow.pop %v612
        %v614 = vmul.f32 %v599, 1.442695
        %v615 = vpow.pop %v614
        %v616 = vsel %vm535, %v601, 0.0
        %v617 = vrot.slane %v616, 4
        %v618 = vadd.f32 %v616, %v617
        %v619 = vrot.slane %v618, 2
        %v620 = vadd.f32 %v618, %v619
        %v621 = vrot.slane %v620, 1
        %v622 = vadd.f32 %v620, %v621
        %v623 = vsel %vm535, %v603, 0.0
        %v624 = vrot.slane %v623, 4
        %v625 = vadd.f32 %v623, %v624
        %v626 = vrot.slane %v625, 2
        %v627 = vadd.f32 %v625, %v626
        %v628 = vrot.slane %v627, 1
        %v629 = vadd.f32 %v627, %v628
        %v630 = vsel %vm535, %v605, 0.0
        %v631 = vrot.slane %v630, 4
        %v632 = vadd.f32 %v630, %v631
        %v633 = vrot.slane %v632, 2
        %v634 = vadd.f32 %v632, %v633
        %v635 = vrot.slane %v634, 1
        %v636 = vadd.f32 %v634, %v635
        %v637 = vsel %vm535, %v607, 0.0
        %v638 = vrot.slane %v637, 4
        %v639 = vadd.f32 %v637, %v638
        %v640 = vrot.slane %v639, 2
        %v641 = vadd.f32 %v639, %v640
        %v642 = vrot.slane %v641, 1
        %v643 = vadd.f32 %v641, %v642
        %v644 = vsel %vm535, %v609, 0.0
        %v645 = vrot.slane %v644, 4
        %v646 = vadd.f32 %v644, %v645
        %v647 = vrot.slane %v646, 2
        %v648 = vadd.f32 %v646, %v647
        %v649 = vrot.slane %v648, 1
        %v650 = vadd.f32 %v648, %v649
        %v651 = vsel %vm535, %v611, 0.0
        %v652 = vrot.slane %v651, 4
        %v653 = vadd.f32 %v651, %v652
        %v654 = vrot.slane %v653, 2
        %v655 = vadd.f32 %v653, %v654
        %v656 = vrot.slane %v655, 1
        %v657 = vadd.f32 %v655, %v656
        %v658 = vsel %vm535, %v613, 0.0
        %v659 = vrot.slane %v658, 4
        %v660 = vadd.f32 %v658, %v659
        %v661 = vrot.slane %v660, 2
        %v662 = vadd.f32 %v660, %v661
        %v663 = vrot.slane %v662, 1
        %v664 = vadd.f32 %v662, %v663
        %v665 = vsel %vm535, %v615, 0.0
        %v666 = vrot.slane %v665, 4
        %v667 = vadd.f32 %v665, %v666
        %v668 = vrot.slane %v667, 2
        %v669 = vadd.f32 %v667, %v668
        %v670 = vrot.slane %v669, 1
        %v671 = vadd.f32 %v669, %v670
        %v672 = vlog2.pop %v622
        %v673 = vmul.f32 %v672, 0.6931472
        %v674 = vlog2.pop %v629
        %v675 = vmul.f32 %v674, 0.6931472
        %v676 = vlog2.pop %v636
        %v677 = vmul.f32 %v676, 0.6931472
        %v678 = vlog2.pop %v643
        %v679 = vmul.f32 %v678, 0.6931472
        %v680 = vlog2.pop %v650
        %v681 = vmul.f32 %v680, 0.6931472
        %v682 = vlog2.pop %v657
        %v683 = vmul.f32 %v682, 0.6931472
        %v684 = vlog2.pop %v664
        %v685 = vmul.f32 %v684, 0.6931472
        %v686 = vlog2.pop %v671
        %v687 = vmul.f32 %v686, 0.6931472
        %v688 = vadd.f32 %v542, %v673
        %v689 = vadd.f32 %v549, %v675
        %v690 = vadd.f32 %v556, %v677
        %v691 = vadd.f32 %v563, %v679
        %v692 = vadd.f32 %v570, %v681
        %v693 = vadd.f32 %v577, %v683
        %v694 = vadd.f32 %v584, %v685
        %v695 = vadd.f32 %v591, %v687
        %v696 = vsel %vm535, %v374, -inf
        %v697 = vrot.slane %v696, 4
        %v698 = vmax.f32 %v696, %v697
        %v699 = vrot.slane %v698, 2
        %v700 = vmax.f32 %v698, %v699
        %v701 = vrot.slane %v700, 1
        %v702 = vmax.f32 %v700, %v701
        %v703 = vsel %vm535, %v519, -inf
        %v704 = vrot.slane %v703, 4
        %v705 = vmax.f32 %v703, %v704
        %v706 = vrot.slane %v705, 2
        %v707 = vmax.f32 %v705, %v706
        %v708 = vrot.slane %v707, 1
        %v709 = vmax.f32 %v707, %v708
        %v710 = vsel %vm535, %v375, -inf
        %v711 = vrot.slane %v710, 4
        %v712 = vmax.f32 %v710, %v711
        %v713 = vrot.slane %v712, 2
        %v714 = vmax.f32 %v712, %v713
        %v715 = vrot.slane %v714, 1
        %v716 = vmax.f32 %v714, %v715
        %v717 = vsel %vm535, %v520, -inf
        %v718 = vrot.slane %v717, 4
        %v719 = vmax.f32 %v717, %v718
        %v720 = vrot.slane %v719, 2
        %v721 = vmax.f32 %v719, %v720
        %v722 = vrot.slane %v721, 1
        %v723 = vmax.f32 %v721, %v722
        %v724 = vsel %vm535, %v376, -inf
        %v725 = vrot.slane %v724, 4
        %v726 = vmax.f32 %v724, %v725
        %v727 = vrot.slane %v726, 2
        %v728 = vmax.f32 %v726, %v727
        %v729 = vrot.slane %v728, 1
        %v730 = vmax.f32 %v728, %v729
        %v731 = vsel %vm535, %v521, -inf
        %v732 = vrot.slane %v731, 4
        %v733 = vmax.f32 %v731, %v732
        %v734 = vrot.slane %v733, 2
        %v735 = vmax.f32 %v733, %v734
        %v736 = vrot.slane %v735, 1
        %v737 = vmax.f32 %v735, %v736
        %v738 = vsel %vm535, %v377, -inf
        %v739 = vrot.slane %v738, 4
        %v740 = vmax.f32 %v738, %v739
        %v741 = vrot.slane %v740, 2
        %v742 = vmax.f32 %v740, %v741
        %v743 = vrot.slane %v742, 1
        %v744 = vmax.f32 %v742, %v743
        %v745 = vsel %vm535, %v522, -inf
        %v746 = vrot.slane %v745, 4
        %v747 = vmax.f32 %v745, %v746
        %v748 = vrot.slane %v747, 2
        %v749 = vmax.f32 %v747, %v748
        %v750 = vrot.slane %v749, 1
        %v751 = vmax.f32 %v749, %v750
        %v760 = vcombine.low %v702, %v709
        %v761 = vcombine.low %v716, %v723
        %v762 = vcombine.low %v730, %v737
        %v763 = vcombine.low %v744, %v751
        %v768 = vsub.f32 %v374, %v760
        %v769 = vsub.f32 %v375, %v761
        %v770 = vsub.f32 %v376, %v762
        %v771 = vsub.f32 %v377, %v763
        %v772 = vmul.f32 %v768, 1.442695
        %v773 = vpow.pop %v772
        %v774 = vmul.f32 %v769, 1.442695
        %v775 = vpow.pop %v774
        %v776 = vmul.f32 %v770, 1.442695
        %v777 = vpow.pop %v776
        %v778 = vmul.f32 %v771, 1.442695
        %v779 = vpow.pop %v778
        %v784 = vcombine.high %v773, %v773
        %v785 = vcombine.high %v775, %v775
        %v786 = vcombine.high %v777, %v777
        %v787 = vcombine.high %v779, %v779
        %v792 = vsel %vm535, %v773, 0.0
        %v793 = vrot.slane %v792, 4
        %v794 = vadd.f32 %v792, %v793
        %v795 = vrot.slane %v794, 2
        %v796 = vadd.f32 %v794, %v795
        %v797 = vrot.slane %v796, 1
        %v798 = vadd.f32 %v796, %v797
        %v799 = vsel %vm535, %v784, 0.0
        %v800 = vrot.slane %v799, 4
        %v801 = vadd.f32 %v799, %v800
        %v802 = vrot.slane %v801, 2
        %v803 = vadd.f32 %v801, %v802
        %v804 = vrot.slane %v803, 1
        %v805 = vadd.f32 %v803, %v804
        %v806 = vsel %vm535, %v775, 0.0
        %v807 = vrot.slane %v806, 4
        %v808 = vadd.f32 %v806, %v807
        %v809 = vrot.slane %v808, 2
        %v810 = vadd.f32 %v808, %v809
        %v811 = vrot.slane %v810, 1
        %v812 = vadd.f32 %v810, %v811
        %v813 = vsel %vm535, %v785, 0.0
        %v814 = vrot.slane %v813, 4
        %v815 = vadd.f32 %v813, %v814
        %v816 = vrot.slane %v815, 2
        %v817 = vadd.f32 %v815, %v816
        %v818 = vrot.slane %v817, 1
        %v819 = vadd.f32 %v817, %v818
        %v820 = vsel %vm535, %v777, 0.0
        %v821 = vrot.slane %v820, 4
        %v822 = vadd.f32 %v820, %v821
        %v823 = vrot.slane %v822, 2
        %v824 = vadd.f32 %v822, %v823
        %v825 = vrot.slane %v824, 1
        %v826 = vadd.f32 %v824, %v825
        %v827 = vsel %vm535, %v786, 0.0
        %v828 = vrot.slane %v827, 4
        %v829 = vadd.f32 %v827, %v828
        %v830 = vrot.slane %v829, 2
        %v831 = vadd.f32 %v829, %v830
        %v832 = vrot.slane %v831, 1
        %v833 = vadd.f32 %v831, %v832
        %v834 = vsel %vm535, %v779, 0.0
        %v835 = vrot.slane %v834, 4
        %v836 = vadd.f32 %v834, %v835
        %v837 = vrot.slane %v836, 2
        %v838 = vadd.f32 %v836, %v837
        %v839 = vrot.slane %v838, 1
        %v840 = vadd.f32 %v838, %v839
        %v841 = vsel %vm535, %v787, 0.0
        %v842 = vrot.slane %v841, 4
        %v843 = vadd.f32 %v841, %v842
        %v844 = vrot.slane %v843, 2
        %v845 = vadd.f32 %v843, %v844
        %v846 = vrot.slane %v845, 1
        %v847 = vadd.f32 %v845, %v846
        %v848 = vlog2.pop %v798
        %v849 = vmul.f32 %v848, 0.6931472
        %v850 = vlog2.pop %v805
        %v851 = vmul.f32 %v850, 0.6931472
        %v852 = vlog2.pop %v812
        %v853 = vmul.f32 %v852, 0.6931472
        %v854 = vlog2.pop %v819
        %v855 = vmul.f32 %v854, 0.6931472
        %v856 = vlog2.pop %v826
        %v857 = vmul.f32 %v856, 0.6931472
        %v858 = vlog2.pop %v833
        %v859 = vmul.f32 %v858, 0.6931472
        %v860 = vlog2.pop %v840
        %v861 = vmul.f32 %v860, 0.6931472
        %v862 = vlog2.pop %v847
        %v863 = vmul.f32 %v862, 0.6931472
        %v864 = vadd.f32 %v702, %v849
        %v865 = vadd.f32 %v709, %v851
        %v866 = vadd.f32 %v716, %v853
        %v867 = vadd.f32 %v723, %v855
        %v868 = vadd.f32 %v730, %v857
        %v869 = vadd.f32 %v737, %v859
        %v870 = vadd.f32 %v744, %v861
        %v871 = vadd.f32 %v751, %v863
        %v872 = vsub.f32 %v688, %v864
        %v873 = vsub.f32 %v689, %v865
        %v874 = vsub.f32 %v690, %v866
        %v875 = vsub.f32 %v691, %v867
        %v876 = vsub.f32 %v692, %v868
        %v877 = vsub.f32 %v693, %v869
        %v878 = vsub.f32 %v694, %v870
        %v879 = vsub.f32 %v695, %v871
        %s880 = smul.u32 %s34, 1024
        %v881 = vlaneseq
        %v882 = vand.u32 %v881, 127
        %v883 = vadd.s32 %v882, 128
        %v884 = vadd.s32 %v882, 256
        %v885 = vadd.s32 %v882, 384
        %v886 = vadd.s32 %v882, 512
        %v887 = vadd.s32 %v882, 640
        %v888 = vadd.s32 %v882, 768
        %v889 = vadd.s32 %v882, 896
        %v890 = vstv %s880
        %v891 = vadd.s32 %v890, %v882
        %v892 = vadd.s32 %v890, %v883
        %v893 = vadd.s32 %v890, %v884
        %v894 = vadd.s32 %v890, %v885
        %v895 = vadd.s32 %v890, %v886
        %v896 = vadd.s32 %v890, %v887
        %v897 = vadd.s32 %v890, %v888
        %v898 = vadd.s32 %v890, %v889
        %s899 = sld [smem:[#allocation4 + %s33]]
        %v900 = vstv %s899
        %vm901 = vcmp.lt.s32.totalorder %v891, %v900
        %vm902 = vcmp.lt.s32.totalorder %v892, %v900
        %vm903 = vcmp.lt.s32.totalorder %v893, %v900
        %vm904 = vcmp.lt.s32.totalorder %v894, %v900
        %vm905 = vcmp.lt.s32.totalorder %v895, %v900
        %vm906 = vcmp.lt.s32.totalorder %v896, %v900
        %vm907 = vcmp.lt.s32.totalorder %v897, %v900
        %vm908 = vcmp.lt.s32.totalorder %v898, %v900
        %v909 = vsel %vm901, %v872, 0.0
        %v910 = vsel %vm902, %v873, 0.0
        %v911 = vsel %vm903, %v874, 0.0
        %v912 = vsel %vm904, %v875, 0.0
        %v913 = vsel %vm905, %v876, 0.0
        %v914 = vsel %vm906, %v877, 0.0
        %v915 = vsel %vm907, %v878, 0.0
        %v916 = vsel %vm908, %v879, 0.0
        %v917 = vld [vmem:[#allocation2] sm:$0xff]
        %v926 = vcombine.low %v909, %v910
        %v927 = vcombine.low %v911, %v912
        %v928 = vcombine.low %v913, %v914
        %v929 = vcombine.low %v915, %v916
        %v931 = vunpack.c.l.s4 1966171168
        %v932 = vunpack.c.0.s8 %v931
        %v933 = vlaneseq
        %v934 = vshrl.u32 %v933, 7
        %v935 = vsub.s32 %v932, %v934
        %v936 = vrot.slane %v926, %v935
        %v938 = vunpack.c.l.s4 1966171168
        %v939 = vunpack.c.0.s8 %v938
        %v940 = vlaneseq
        %v941 = vshrl.u32 %v940, 7
        %v942 = vsub.s32 %v939, %v941
        %v943 = vrot.slane %v927, %v942
        %v945 = vunpack.c.l.s4 1966171168
        %v946 = vunpack.c.0.s8 %v945
        %v947 = vlaneseq
        %v948 = vshrl.u32 %v947, 7
        %v949 = vsub.s32 %v946, %v948
        %v950 = vrot.slane %v928, %v949
        %v952 = vunpack.c.l.s4 1966171168
        %v953 = vunpack.c.0.s8 %v952
        %v954 = vlaneseq
        %v955 = vshrl.u32 %v954, 7
        %v956 = vsub.s32 %v953, %v955
        %v957 = vrot.slane %v929, %v956
        %v958 = vcombine.low %v936, %v943
        %v959 = vcombine.low %v950, %v957
        %v961 = vunpack.c.l.s4 1966171168
        %v962 = vunpack.c.0.s8 %v961
        %v963 = vlaneseq
        %v964 = vshrl.u32 %v963, 7
        %v965 = vsub.s32 %v962, %v964
        %v966 = vrot.slane %v958, %v965
        %v968 = vunpack.c.l.s4 1966171168
        %v969 = vunpack.c.0.s8 %v968
        %v970 = vlaneseq
        %v971 = vshrl.u32 %v970, 7
        %v972 = vsub.s32 %v969, %v971
        %v973 = vrot.slane %v959, %v972
        %v974 = vcombine.low %v966, %v973
        %v976 = vadd.f32 %v917, %v974
        %977 = vst [vmem:[#allocation2] sm:$0xff] %v976
        // Predicated region
        $region57: #{tpu_custom_call.1} parent=35 // pred_check
          %p978 = pneg %p360
        $region58: #{tpu_custom_call.1} parent=35 // pred_check_branch
          %980 = sbr.rel (%p978) target = $region60
        $region59: #{tpu_custom_call.1} parent=35 // pred_region
          %v981 = vld [vmem:[#allocation2] sm:$0xff]
          %v983 = vlaneseq
          %v984 = vshrl.u32 %v983, 7
          %v985 = vsub.s32 0, %v984
          %v986 = vrot.slane %v981, %v985
          %v987 = vlaneseq
          %v988 = vshrl.u32 %v987, 7
          %v989 = vsub.s32 1, %v988
          %v990 = vrot.slane %v981, %v989
          %v991 = vlaneseq
          %v992 = vshrl.u32 %v991, 7
          %v993 = vsub.s32 2, %v992
          %v994 = vrot.slane %v981, %v993
          %v995 = vlaneseq
          %v996 = vshrl.u32 %v995, 7
          %v997 = vsub.s32 3, %v996
          %v998 = vrot.slane %v981, %v997
          %v999 = vlaneseq
          %v1000 = vshrl.u32 %v999, 7
          %v1001 = vsub.s32 4, %v1000
          %v1002 = vrot.slane %v981, %v1001
          %v1003 = vlaneseq
          %v1004 = vshrl.u32 %v1003, 7
          %v1005 = vsub.s32 5, %v1004
          %v1006 = vrot.slane %v981, %v1005
          %v1007 = vlaneseq
          %v1008 = vshrl.u32 %v1007, 7
          %v1009 = vsub.s32 6, %v1008
          %v1010 = vrot.slane %v981, %v1009
          %v1011 = vlaneseq
          %v1012 = vshrl.u32 %v1011, 7
          %v1013 = vsub.s32 7, %v1012
          %v1014 = vrot.slane %v981, %v1013
          %vm1023 = vcmask 1040384
          %v1024 = vsel %vm1023, %v986, 0.0
          %v1025 = vsel %vm1023, %v990, 0.0
          %v1026 = vadd.f32 %v1024, %v1025
          %v1027 = vsel %vm1023, %v994, 0.0
          %v1028 = vadd.f32 %v1026, %v1027
          %v1029 = vsel %vm1023, %v998, 0.0
          %v1030 = vadd.f32 %v1028, %v1029
          %v1031 = vsel %vm1023, %v1002, 0.0
          %v1032 = vadd.f32 %v1030, %v1031
          %v1033 = vsel %vm1023, %v1006, 0.0
          %v1034 = vadd.f32 %v1032, %v1033
          %v1035 = vsel %vm1023, %v1010, 0.0
          %v1036 = vadd.f32 %v1034, %v1035
          %v1037 = vsel %vm1023, %v1014, 0.0
          %v1038 = vadd.f32 %v1036, %v1037
          %1039 = vadd.xlane.f32.xlu0 %v1038
          %v1040 = vpop.xlane.xlu0 %1039
          %vm1041 = vcmask 0
          %1042 = vst.msk [vmem:[%s359] sm:$0x1] %vm1041, %v1040
        $region60: #{tpu_custom_call.1} parent=35 // pred_fallthru
          _
        %p1043 = scmp.lt.s32.totalorder %s33, 1
        %s1044 = scalar_select %p1043, %s33, 1
        %s1045 = scalar_lea.vmem %s5, %s1044
        // Predicated region
        $region61: #{tpu_custom_call.1} parent=35 // pred_check
          %p1046 = pneg %p171
        $region62: #{tpu_custom_call.1} parent=35 // pred_check_branch
          %1048 = sbr.rel (%p1046) target = $region64
        $region63: #{tpu_custom_call.1} parent=35 // pred_region
          _
        $region64: #{tpu_custom_call.1} parent=35 // pred_fallthru
          _
      $region36: #{tpu_custom_call.1} parent=5 // pred_fallthru
        _
      %p1049 = scmp.le.s32.totalorder 2, %s24
      // Predicated region
      $region65: #{tpu_custom_call.1} parent=5 // pred_check
        %p1050 = pneg %p1049
      $region66: #{tpu_custom_call.1} parent=5 // pred_check_branch
        %1052 = sbr.rel (%p1050) target = $region68
      $region67: #{tpu_custom_call.1} parent=5 // pred_region
        %s1053 = ssub.s32 %s24, 2
        // Predicated region
        $region69: #{tpu_custom_call.1} parent=67 // pred_check
          %p1054 = pneg %p177
        $region70: #{tpu_custom_call.1} parent=67 // pred_check_branch
          %1056 = sbr.rel (%p1054) target = $region72
        $region71: #{tpu_custom_call.1} parent=67 // pred_region
          %p1057 = scmp.lt.s32.totalorder %s35, 1
          %s1058 = scalar_select %p1057, %s35, 1
          %s1059 = scalar_lea.vmem %s5, %s1058
        $region72: #{tpu_custom_call.1} parent=67 // pred_fallthru
          _
      $region68: #{tpu_custom_call.1} parent=5 // pred_fallthru
        _
    $region6: #{tpu_custom_call.1} parent=1 // loop_footer
      %s28 = sadd.s32 1, %s24
    $region7: #{tpu_custom_call.1} parent=1 // loop_footer_branch
      %23 = sbr.rel target = $region3
    $region8: #{tpu_custom_call.1} parent=1 // loop_exit
      _
    %1060 = vsyncpa [#allocation6], 1
    %s1061 = scalar_lea.sflag [#allocation6], 1
    %1062 = vsyncpa %s1061, 1
    %1063 = vsyncpa [#allocation8], 1
    %s1064 = scalar_lea.sflag [#allocation8], 1
    %1065 = vsyncpa %s1064, 1
    %1066 = vsyncpa [#allocation11], 1
    %s1067 = scalar_lea.sflag [#allocation11], 1
    %1068 = vsyncpa %s1067, 1

</llo_original>
